<compile_context>
chip_gen: v6e
topology: v6e:2x2x1
jax: 0.10.0
libtpu: 0.0.40
codegen_flags: <defaults>
</compile_context>

<pallas_src>
import functools

import jax
import jax.numpy as jnp
import numpy as np
from jax import lax
from jax.experimental import pallas as pl
from jax.experimental.pallas import tpu as pltpu


def _round_up(x, m):
    return ((x + m - 1) // m) * m


def _cdiv(a, b):
    return (a + b - 1) // b


def _conv_bn_prelu_kernel(x_ref, w_ref, p_ref, o_ref, *, offsets, stride):
    """One grid step = one (Cout, tl) channel-major, lane-dense output block.

    x_ref: (Cin, Lxb)       bf16  flattened, zero-padded input window
    w_ref: (K*K, Cout, Cin) bf16  per-tap weights, BN scale pre-folded
    p_ref: (Cout, 2)        f32   [:, 0] = BN shift, [:, 1] = PReLU alpha
    o_ref: (Cout, tl)       f32   tl % 128 == 0  (unmasked vst)
    """
    cout, tl = o_ref.shape
    acc = jnp.zeros((cout, tl), jnp.float32)
    for t, off in enumerate(offsets):                      # K*K taps, unrolled
        if stride == 1:
            xs = x_ref[:, pl.ds(off, tl)]                  # static lane slice
        else:
            # TODO(synk): strided lane read (stride > 1) is not exercised by the demo.
            xs = x_ref[:, pl.ds(off, tl, stride=stride)]
        # bf16 x bf16 -> f32: native MXU mode, f32 accumulation.
        acc = acc + jnp.dot(w_ref[t], xs, preferred_element_type=jnp.float32)
    shift = p_ref[:, 0:1]                                  # (Cout, 1) lane-broadcast
    alpha = p_ref[:, 1:2]
    y = acc + shift                                        # folded BatchNorm (eval)
    o_ref[...] = jnp.where(y > 0, y, alpha * y).astype(o_ref.dtype)


def conv_bn_prelu(x, weight, gamma, beta, running_mean, running_var, alpha,
                  *, stride, eps=1e-5, tl_max=2048):
    """x: (N, Cin, H, W) float32 NCHW.  weight: (Cout, Cin, K, K).  Returns NCHW f32."""
    N, Cin, H, W = x.shape
    Cout, _, K, _ = weight.shape
    pad = (K - 1) // 2                     # matches the PyTorch module (odd K)
    Ho = (H + 2 * pad - K) // stride + 1
    Wo = (W + 2 * pad - K) // stride + 1
    Hp, Wp = H + 2 * pad, W + 2 * pad

    # Extended output positions per image: q = ho*Wp + wo with wo in [0, Wp).
    # Only wo < Wo are valid; the rest are garbage lanes computed for free.
    Lq = Ho * Wp
    tl = min(_round_up(Lq, 128), tl_max)   # lane-dense tile (multiple of 128)
    num_l = _cdiv(Lq, tl)
    Lq_pad = num_l * tl

    offsets = tuple(kh * Wp + kw for kh in range(K) for kw in range(K))
    off_max = offsets[-1]
    # Per-block input window length (all in-kernel slicing is static).
    Lw = stride * (tl - 1) + off_max + 1
    Lxb = _round_up(Lw, 128)
    Lin_needed = max(stride * (num_l - 1) * tl + Lxb, Hp * Wp)

    # ---- glue: ONE fused pad (spatial + zero tail rows) + bf16 cast ----
    extra_rows = _cdiv(max(Lin_needed - Hp * Wp, 0), Wp)
    Hp_ext = Hp + extra_rows
    Lin = Hp_ext * Wp
    x_flat = jnp.pad(
        x, ((0, 0), (0, 0), (pad, pad + extra_rows), (pad, pad))
    ).astype(jnp.bfloat16).reshape(N, Cin, Lin)            # (N, Cin, Lin) bf16

    if num_l == 1:
        # Feed the flat image directly; BlockSpec pulls the (Cin, Lxb) prefix.
        x_in = x_flat
        G = N
    else:
        # TODO(synk): halo windows duplicated in HBM for the multi-tile case
        # (overlapping windows are not expressible with a Blocked index_map).
        x_in = jnp.stack(
            [x_flat[:, :, stride * j * tl: stride * j * tl + Lxb]
             for j in range(num_l)], axis=1)               # (N, num_l, Cin, Lxb)
        x_in = x_in.reshape(N * num_l, Cin, Lxb)
        G = N * num_l

    # ---- parameter folding (BN scale into weights; shift+alpha stacked) ----
    scale = (gamma / jnp.sqrt(running_var + eps)).astype(jnp.float32)    # (Cout,)
    shift = (beta - running_mean * scale).astype(jnp.float32)            # (Cout,)
    alpha_vec = jnp.broadcast_to(jnp.asarray(alpha, jnp.float32).ravel(), (Cout,))
    w_scaled = weight.astype(jnp.float32) * scale[:, None, None, None]   # (Cout,Cin,K,K)
    w_taps = (w_scaled.transpose(2, 3, 0, 1)
              .reshape(K * K, Cout, Cin).astype(jnp.bfloat16))           # (KK,Cout,Cin)
    params = jnp.stack([shift, alpha_vec], axis=1)                       # (Cout, 2) f32

    # ---- fused Pallas kernel ----
    kernel = functools.partial(_conv_bn_prelu_kernel, offsets=offsets, stride=stride)
    flops = 2 * G * tl * K * K * Cin * Cout
    bytes_accessed = (G * Cin * Lxb * 2 + K * K * Cout * Cin * 2
                      + Cout * 2 * 4 + G * Cout * tl * 4)

    out_blocks = pl.pallas_call(
        kernel,
        out_shape=jax.ShapeDtypeStruct((G, Cout, tl), jnp.float32),
        grid=(G,),
        in_specs=[
            pl.BlockSpec((None, Cin, Lxb), lambda g: (g, 0, 0)),
            pl.BlockSpec((K * K, Cout, Cin), lambda g: (0, 0, 0)),
            pl.BlockSpec((Cout, 2), lambda g: (0, 0)),
        ],
        out_specs=pl.BlockSpec((None, Cout, tl), lambda g: (g, 0, 0)),
        compiler_params=pltpu.CompilerParams(
            dimension_semantics=("parallel",)),
        cost_estimate=pl.CostEstimate(
            flops=flops, transcendentals=0, bytes_accessed=bytes_accessed),
    )(x_in, w_taps, params)

    # ---- reassemble NCHW: reshape + drop garbage columns (no transpose pass) ----
    if num_l == 1:
        out_ext = out_blocks.reshape(N, Cout, Lq_pad)
    else:
        out_ext = (out_blocks.reshape(N, num_l, Cout, tl)
                   .transpose(0, 2, 1, 3).reshape(N, Cout, Lq_pad))
    out = out_ext[:, :, :Lq].reshape(N, Cout, Ho, Wp)[:, :, :, :Wo]
    return out


def _reference(x, weight, gamma, beta, running_mean, running_var, alpha,
               *, stride, eps=1e-5):
    K = weight.shape[2]
    pad = (K - 1) // 2
    conv = lax.conv_general_dilated(
        x, weight, window_strides=(stride, stride),
        padding=[(pad, pad), (pad, pad)],
        dimension_numbers=("NCHW", "OIHW", "NCHW"))
    s = gamma / jnp.sqrt(running_var + eps)
    b = beta - running_mean * s
    y = conv * s[None, :, None, None] + b[None, :, None, None]
    a = alpha[None, :, None, None]
    return jnp.where(y > 0, y, a * y)


if __name__ == "__main__":
    # Module config: ConvBNPReLU(in_ch=4, out_ch=8, ksize=3, stride=1)
    in_ch, out_ch, ksize, stride = 4, 8, 3, 1
    N, H, W = 2, 16, 16

    key = jax.random.PRNGKey(0)
    kx, kw, kg, kb, km, kv = jax.random.split(key, 6)

    x = jax.random.normal(kx, (N, in_ch, H, W), dtype=jnp.float32)
    weight = jax.random.normal(kw, (out_ch, in_ch, ksize, ksize),
                               dtype=jnp.float32) * 0.1
    gamma = 1.0 + 0.1 * jax.random.normal(kg, (out_ch,), dtype=jnp.float32)
    beta = 0.1 * jax.random.normal(kb, (out_ch,), dtype=jnp.float32)
    running_mean = 0.1 * jax.random.normal(km, (out_ch,), dtype=jnp.float32)
    running_var = jnp.abs(jax.random.normal(kv, (out_ch,), dtype=jnp.float32)) + 0.5
    alpha = jnp.full((out_ch,), 0.25, dtype=jnp.float32)   # PReLU default init

    fn = jax.jit(functools.partial(conv_bn_prelu, stride=stride))
    out = jax.block_until_ready(
        fn(x, weight, gamma, beta, running_mean, running_var, alpha))

    ref = _reference(x, weight, gamma, beta, running_mean, running_var, alpha,
                     stride=stride)
    # bf16 input/weight streams -> loosened tolerance (f32 accumulation preserved).
    np.testing.assert_allclose(np.asarray(out), np.asarray(ref),
                               rtol=2e-2, atol=2e-2)
    print("KERNEL_OK")
</pallas_src>

<mosaic_0001>
module attributes {stable_mosaic.version = 11 : i64} {
  func.func @_conv_bn_prelu_kernel(%arg0: i32, %arg1: memref<1x4x512xbf16, #tpu.memory_space<vmem>>, %arg2: memref<9x8x4xbf16, #tpu.memory_space<vmem>>, %arg3: memref<8x2xf32, #tpu.memory_space<vmem>>, %arg4: memref<1x8x384xf32, #tpu.memory_space<vmem>>) attributes {dimension_semantics = [#tpu.dimension_semantics<parallel>], iteration_bounds = array<i64: 2>, scalar_prefetch = 0 : i64, scratch_operands = 0 : i64, tpu.core_type = #tpu.core_type<tc>, window_params = [{transform_indices = @transform_0, window_bounds = array<i64: 1, 4, 512>}, {pipeline_mode = #tpu.pipeline_mode<synchronous>, transform_indices = @transform_1, window_bounds = array<i64: 9, 8, 4>}, {pipeline_mode = #tpu.pipeline_mode<synchronous>, transform_indices = @transform_2, window_bounds = array<i64: 8, 2>}, {transform_indices = @transform_3, window_bounds = array<i64: 1, 8, 384>}]} {
    %cst = arith.constant 0.000000e+00 : f32
    %0 = vector.broadcast %cst : f32 to vector<8x384xf32>
    %c0 = arith.constant 0 : index
    %c0_0 = arith.constant 0 : index
    %c0_1 = arith.constant 0 : index
    %1 = vector.load %arg1[%c0, %c0_0, %c0_1] : memref<1x4x512xbf16, #tpu.memory_space<vmem>>, vector<1x4x384xbf16>
    %2 = vector.shape_cast %1 : vector<1x4x384xbf16> to vector<4x384xbf16>
    %c0_2 = arith.constant 0 : index
    %c0_3 = arith.constant 0 : index
    %c0_4 = arith.constant 0 : index
    %3 = vector.load %arg2[%c0_2, %c0_3, %c0_4] : memref<9x8x4xbf16, #tpu.memory_space<vmem>>, vector<1x8x4xbf16>
    %4 = vector.shape_cast %3 : vector<1x8x4xbf16> to vector<8x4xbf16>
    %cst_5 = arith.constant dense<0.000000e+00> : vector<8x384xf32>
    %5 = tpu.matmul %4, %2, %cst_5 {dimension_numbers = #tpu.dot_dimension_numbers<[1], [0], [0], [1], [0, 0, 1, 1], [], []>} : vector<8x4xbf16>, vector<4x384xbf16>, vector<8x384xf32> -> vector<8x384xf32>
    %6 = arith.addf %0, %5 : vector<8x384xf32>
    %c0_6 = arith.constant 0 : index
    %c0_7 = arith.constant 0 : index
    %c1 = arith.constant 1 : index
    %7 = vector.load %arg1[%c0_6, %c0_7, %c1] : memref<1x4x512xbf16, #tpu.memory_space<vmem>>, vector<1x4x384xbf16>
    %8 = vector.shape_cast %7 : vector<1x4x384xbf16> to vector<4x384xbf16>
    %c1_8 = arith.constant 1 : index
    %c0_9 = arith.constant 0 : index
    %c0_10 = arith.constant 0 : index
    %9 = vector.load %arg2[%c1_8, %c0_9, %c0_10] : memref<9x8x4xbf16, #tpu.memory_space<vmem>>, vector<1x8x4xbf16>
    %10 = vector.shape_cast %9 : vector<1x8x4xbf16> to vector<8x4xbf16>
    %cst_11 = arith.constant dense<0.000000e+00> : vector<8x384xf32>
    %11 = tpu.matmul %10, %8, %cst_11 {dimension_numbers = #tpu.dot_dimension_numbers<[1], [0], [0], [1], [0, 0, 1, 1], [], []>} : vector<8x4xbf16>, vector<4x384xbf16>, vector<8x384xf32> -> vector<8x384xf32>
    %12 = arith.addf %6, %11 : vector<8x384xf32>
    %c0_12 = arith.constant 0 : index
    %c0_13 = arith.constant 0 : index
    %c2 = arith.constant 2 : index
    %13 = vector.load %arg1[%c0_12, %c0_13, %c2] : memref<1x4x512xbf16, #tpu.memory_space<vmem>>, vector<1x4x384xbf16>
    %14 = vector.shape_cast %13 : vector<1x4x384xbf16> to vector<4x384xbf16>
    %c2_14 = arith.constant 2 : index
    %c0_15 = arith.constant 0 : index
    %c0_16 = arith.constant 0 : index
    %15 = vector.load %arg2[%c2_14, %c0_15, %c0_16] : memref<9x8x4xbf16, #tpu.memory_space<vmem>>, vector<1x8x4xbf16>
    %16 = vector.shape_cast %15 : vector<1x8x4xbf16> to vector<8x4xbf16>
    %cst_17 = arith.constant dense<0.000000e+00> : vector<8x384xf32>
    %17 = tpu.matmul %16, %14, %cst_17 {dimension_numbers = #tpu.dot_dimension_numbers<[1], [0], [0], [1], [0, 0, 1, 1], [], []>} : vector<8x4xbf16>, vector<4x384xbf16>, vector<8x384xf32> -> vector<8x384xf32>
    %18 = arith.addf %12, %17 : vector<8x384xf32>
    %c0_18 = arith.constant 0 : index
    %c0_19 = arith.constant 0 : index
    %c18 = arith.constant 18 : index
    %19 = vector.load %arg1[%c0_18, %c0_19, %c18] : memref<1x4x512xbf16, #tpu.memory_space<vmem>>, vector<1x4x384xbf16>
    %20 = vector.shape_cast %19 : vector<1x4x384xbf16> to vector<4x384xbf16>
    %c3 = arith.constant 3 : index
    %c0_20 = arith.constant 0 : index
    %c0_21 = arith.constant 0 : index
    %21 = vector.load %arg2[%c3, %c0_20, %c0_21] : memref<9x8x4xbf16, #tpu.memory_space<vmem>>, vector<1x8x4xbf16>
    %22 = vector.shape_cast %21 : vector<1x8x4xbf16> to vector<8x4xbf16>
    %cst_22 = arith.constant dense<0.000000e+00> : vector<8x384xf32>
    %23 = tpu.matmul %22, %20, %cst_22 {dimension_numbers = #tpu.dot_dimension_numbers<[1], [0], [0], [1], [0, 0, 1, 1], [], []>} : vector<8x4xbf16>, vector<4x384xbf16>, vector<8x384xf32> -> vector<8x384xf32>
    %24 = arith.addf %18, %23 : vector<8x384xf32>
    %c0_23 = arith.constant 0 : index
    %c0_24 = arith.constant 0 : index
    %c19 = arith.constant 19 : index
    %25 = vector.load %arg1[%c0_23, %c0_24, %c19] : memref<1x4x512xbf16, #tpu.memory_space<vmem>>, vector<1x4x384xbf16>
    %26 = vector.shape_cast %25 : vector<1x4x384xbf16> to vector<4x384xbf16>
    %c4 = arith.constant 4 : index
    %c0_25 = arith.constant 0 : index
    %c0_26 = arith.constant 0 : index
    %27 = vector.load %arg2[%c4, %c0_25, %c0_26] : memref<9x8x4xbf16, #tpu.memory_space<vmem>>, vector<1x8x4xbf16>
    %28 = vector.shape_cast %27 : vector<1x8x4xbf16> to vector<8x4xbf16>
    %cst_27 = arith.constant dense<0.000000e+00> : vector<8x384xf32>
    %29 = tpu.matmul %28, %26, %cst_27 {dimension_numbers = #tpu.dot_dimension_numbers<[1], [0], [0], [1], [0, 0, 1, 1], [], []>} : vector<8x4xbf16>, vector<4x384xbf16>, vector<8x384xf32> -> vector<8x384xf32>
    %30 = arith.addf %24, %29 : vector<8x384xf32>
    %c0_28 = arith.constant 0 : index
    %c0_29 = arith.constant 0 : index
    %c20 = arith.constant 20 : index
    %31 = vector.load %arg1[%c0_28, %c0_29, %c20] : memref<1x4x512xbf16, #tpu.memory_space<vmem>>, vector<1x4x384xbf16>
    %32 = vector.shape_cast %31 : vector<1x4x384xbf16> to vector<4x384xbf16>
    %c5 = arith.constant 5 : index
    %c0_30 = arith.constant 0 : index
    %c0_31 = arith.constant 0 : index
    %33 = vector.load %arg2[%c5, %c0_30, %c0_31] : memref<9x8x4xbf16, #tpu.memory_space<vmem>>, vector<1x8x4xbf16>
    %34 = vector.shape_cast %33 : vector<1x8x4xbf16> to vector<8x4xbf16>
    %cst_32 = arith.constant dense<0.000000e+00> : vector<8x384xf32>
    %35 = tpu.matmul %34, %32, %cst_32 {dimension_numbers = #tpu.dot_dimension_numbers<[1], [0], [0], [1], [0, 0, 1, 1], [], []>} : vector<8x4xbf16>, vector<4x384xbf16>, vector<8x384xf32> -> vector<8x384xf32>
    %36 = arith.addf %30, %35 : vector<8x384xf32>
    %c0_33 = arith.constant 0 : index
    %c0_34 = arith.constant 0 : index
    %c36 = arith.constant 36 : index
    %37 = vector.load %arg1[%c0_33, %c0_34, %c36] : memref<1x4x512xbf16, #tpu.memory_space<vmem>>, vector<1x4x384xbf16>
    %38 = vector.shape_cast %37 : vector<1x4x384xbf16> to vector<4x384xbf16>
    %c6 = arith.constant 6 : index
    %c0_35 = arith.constant 0 : index
    %c0_36 = arith.constant 0 : index
    %39 = vector.load %arg2[%c6, %c0_35, %c0_36] : memref<9x8x4xbf16, #tpu.memory_space<vmem>>, vector<1x8x4xbf16>
    %40 = vector.shape_cast %39 : vector<1x8x4xbf16> to vector<8x4xbf16>
    %cst_37 = arith.constant dense<0.000000e+00> : vector<8x384xf32>
    %41 = tpu.matmul %40, %38, %cst_37 {dimension_numbers = #tpu.dot_dimension_numbers<[1], [0], [0], [1], [0, 0, 1, 1], [], []>} : vector<8x4xbf16>, vector<4x384xbf16>, vector<8x384xf32> -> vector<8x384xf32>
    %42 = arith.addf %36, %41 : vector<8x384xf32>
    %c0_38 = arith.constant 0 : index
    %c0_39 = arith.constant 0 : index
    %c37 = arith.constant 37 : index
    %43 = vector.load %arg1[%c0_38, %c0_39, %c37] : memref<1x4x512xbf16, #tpu.memory_space<vmem>>, vector<1x4x384xbf16>
    %44 = vector.shape_cast %43 : vector<1x4x384xbf16> to vector<4x384xbf16>
    %c7 = arith.constant 7 : index
    %c0_40 = arith.constant 0 : index
    %c0_41 = arith.constant 0 : index
    %45 = vector.load %arg2[%c7, %c0_40, %c0_41] : memref<9x8x4xbf16, #tpu.memory_space<vmem>>, vector<1x8x4xbf16>
    %46 = vector.shape_cast %45 : vector<1x8x4xbf16> to vector<8x4xbf16>
    %cst_42 = arith.constant dense<0.000000e+00> : vector<8x384xf32>
    %47 = tpu.matmul %46, %44, %cst_42 {dimension_numbers = #tpu.dot_dimension_numbers<[1], [0], [0], [1], [0, 0, 1, 1], [], []>} : vector<8x4xbf16>, vector<4x384xbf16>, vector<8x384xf32> -> vector<8x384xf32>
    %48 = arith.addf %42, %47 : vector<8x384xf32>
    %c0_43 = arith.constant 0 : index
    %c0_44 = arith.constant 0 : index
    %c38 = arith.constant 38 : index
    %49 = vector.load %arg1[%c0_43, %c0_44, %c38] : memref<1x4x512xbf16, #tpu.memory_space<vmem>>, vector<1x4x384xbf16>
    %50 = vector.shape_cast %49 : vector<1x4x384xbf16> to vector<4x384xbf16>
    %c8 = arith.constant 8 : index
    %c0_45 = arith.constant 0 : index
    %c0_46 = arith.constant 0 : index
    %51 = vector.load %arg2[%c8, %c0_45, %c0_46] : memref<9x8x4xbf16, #tpu.memory_space<vmem>>, vector<1x8x4xbf16>
    %52 = vector.shape_cast %51 : vector<1x8x4xbf16> to vector<8x4xbf16>
    %cst_47 = arith.constant dense<0.000000e+00> : vector<8x384xf32>
    %53 = tpu.matmul %52, %50, %cst_47 {dimension_numbers = #tpu.dot_dimension_numbers<[1], [0], [0], [1], [0, 0, 1, 1], [], []>} : vector<8x4xbf16>, vector<4x384xbf16>, vector<8x384xf32> -> vector<8x384xf32>
    %54 = arith.addf %48, %53 : vector<8x384xf32>
    %c0_48 = arith.constant 0 : index
    %c0_49 = arith.constant 0 : index
    %55 = vector.load %arg3[%c0_48, %c0_49] : memref<8x2xf32, #tpu.memory_space<vmem>>, vector<8x1xf32>
    %c0_50 = arith.constant 0 : index
    %c1_51 = arith.constant 1 : index
    %56 = vector.load %arg3[%c0_50, %c1_51] : memref<8x2xf32, #tpu.memory_space<vmem>>, vector<8x1xf32>
    %57 = vector.broadcast %55 : vector<8x1xf32> to vector<8x384xf32>
    %58 = arith.addf %54, %57 : vector<8x384xf32>
    %cst_52 = arith.constant 0.000000e+00 : f32
    %59 = vector.broadcast %cst_52 : f32 to vector<8x384xf32>
    %60 = arith.cmpf ogt, %58, %59 : vector<8x384xf32>
    %61 = vector.broadcast %56 : vector<8x1xf32> to vector<8x384xf32>
    %62 = arith.mulf %61, %58 : vector<8x384xf32>
    %63 = arith.select %60, %58, %62 : vector<8x384xi1>, vector<8x384xf32>
    %c0_53 = arith.constant 0 : index
    %c0_54 = arith.constant 0 : index
    %c0_55 = arith.constant 0 : index
    %64 = vector.load %arg4[%c0_53, %c0_54, %c0_55] : memref<1x8x384xf32, #tpu.memory_space<vmem>>, vector<1x8x384xf32>
    %65 = vector.shape_cast %64 : vector<1x8x384xf32> to vector<8x384xf32>
    %66 = vector.shape_cast %63 : vector<8x384xf32> to vector<1x8x384xf32>
    tpu.vector_store %arg4[%c0_53, %c0_54, %c0_55], %66 {strides = array<i32>} : memref<1x8x384xf32, #tpu.memory_space<vmem>>, vector<1x8x384xf32>,
    return
  }
  func.func @transform_0(%arg0: i32) -> (i32, i32, i32) {
    %c0_i32 = arith.constant 0 : i32
    %c0_i32_0 = arith.constant 0 : i32
    %c0_i32_1 = arith.constant 0 : i32
    return %arg0, %c0_i32, %c0_i32_0 : i32, i32, i32
  }
  func.func @transform_1(%arg0: i32) -> (i32, i32, i32) {
    %c0_i32 = arith.constant 0 : i32
    %c0_i32_0 = arith.constant 0 : i32
    %c0_i32_1 = arith.constant 0 : i32
    %c0_i32_2 = arith.constant 0 : i32
    return %c0_i32, %c0_i32_0, %c0_i32_1 : i32, i32, i32
  }
  func.func @transform_2(%arg0: i32) -> (i32, i32) {
    %c0_i32 = arith.constant 0 : i32
    %c0_i32_0 = arith.constant 0 : i32
    %c0_i32_1 = arith.constant 0 : i32
    return %c0_i32, %c0_i32_0 : i32, i32
  }
  func.func @transform_3(%arg0: i32) -> (i32, i32, i32) {
    %c0_i32 = arith.constant 0 : i32
    %c0_i32_0 = arith.constant 0 : i32
    %c0_i32_1 = arith.constant 0 : i32
    return %arg0, %c0_i32, %c0_i32_0 : i32, i32, i32
  }
}

</mosaic_0001>

<llo_original>
// kernel: conv_bn_prelu.1
$region0: #{conv_bn_prelu.1}
  #allocation0 [shape = 'u32[]', space=smem, size = 0x4, offset = 0x4, fixed_abs, tag = 'smem constant byte address 0x4 - core index']
  #allocation1 [shape = 'u32[144,128]{1,0:T(1,128)}', space=vmem, size = 0x12000, scoped, tag = 'internal scratch']
  %s0 = inlined_call_operand.vmem [shape: bf16[2,4,522], index: 0, kind: input, shape index: {}]
  %s1 = inlined_call_operand.vmem [shape: bf16[9,8,4], index: 1, kind: input, shape index: {}]
  %s2 = inlined_call_operand.vmem [shape: f32[8,2], index: 2, kind: input, shape index: {}]
  %s3 = inlined_call_operand.vmem [shape: f32[2,8,384], index: 3, kind: output, shape index: {}]
  %s4 = sld [smem:[#allocation0]]
  $region45: #{conv_bn_prelu.1} parent=0
    _
  %s6 = ssub.s32 1, %s4
  %s7 = scalar_select 0, %s6, %s4
  loop: start=0, step=1, limit=4
  $region2: #{conv_bn_prelu.1} parent=0 // loop_pre_header
    _
  $region3: #{conv_bn_prelu.1} parent=0 // loop_header
    %s9 = sphi 0, %s13
    %p10 = scmp.ge.s32.totalorder %s9, 4
    %s19 = sphi 0, %s21
    %s22 = sphi 0, %s19
    %s23 = sphi 0, %s22
    %s39 = sphi 0, %s23
    %s43 = sphi 0, %s43
    %s45 = sphi 0, %s43
    %s46 = sphi 0, %s45
    %s60 = sphi 0, %s46
    %s64 = sphi 0, %s64
    %s66 = sphi 0, %s64
    %s67 = sphi 0, %s66
    %s81 = sphi 0, %s67
    %s87 = sphi 0, %s89
    %s90 = sphi 0, %s87
    %s91 = sphi 0, %s90
    %s107 = sphi 0, %s91
  $region4: #{conv_bn_prelu.1} parent=0 // loop_header_branch
    %12 = sbr.rel (%p10) target = $region8
  $region5: #{conv_bn_prelu.1} parent=0 // loop_body
    %s14 = ssub.s32 %s9, 1
    %s15 = ssub.s32 %s9, 2
    %s16 = sadd.s32 %s9, 1
    %s17 = ssub.s32 %s9, %s16
    %p18 = scmp.eq.s32.totalorder %s17, 0
    %s20 = sadd.s32 %s19, 1
    %s21 = scalar_select %p18, %s19, %s20
    %p24 = pneg %p18
    %p25 = scmp.eq.s32.totalorder %s9, 1
    %p26 = por %p24, %p25
    %p27 = scmp.ne.s32.totalorder %s19, %s22
    %p28 = scmp.eq.s32.totalorder %s9, 0
    %p29 = por %p27, %p28
    %p30 = scmp.ne.s32.totalorder %s19, %s22
    %p31 = scmp.eq.s32.totalorder %s14, 1
    %p32 = por %p30, %p31
    %p33 = scmp.ne.s32.totalorder %s22, %s23
    %p34 = scmp.eq.s32.totalorder %s14, 0
    %p35 = por %p33, %p34
    %p36 = scmp.ne.s32.totalorder %s22, %s23
    %p37 = scmp.eq.s32.totalorder %s15, 1
    %p38 = por %p36, %p37
    %p40 = scmp.ne.s32.totalorder %s23, %s39
    %p41 = scmp.eq.s32.totalorder %s15, 0
    %p42 = por %p40, %p41
    %s44 = sadd.s32 %s43, 1
    %p47 = scmp.eq.s32.totalorder %s9, 1
    %p48 = scmp.ne.s32.totalorder %s43, %s45
    %p49 = scmp.eq.s32.totalorder %s9, 0
    %p50 = por %p48, %p49
    %p51 = scmp.ne.s32.totalorder %s43, %s45
    %p52 = scmp.eq.s32.totalorder %s14, 1
    %p53 = por %p51, %p52
    %p54 = scmp.ne.s32.totalorder %s45, %s46
    %p55 = scmp.eq.s32.totalorder %s14, 0
    %p56 = por %p54, %p55
    %p57 = scmp.ne.s32.totalorder %s45, %s46
    %p58 = scmp.eq.s32.totalorder %s15, 1
    %p59 = por %p57, %p58
    %p61 = scmp.ne.s32.totalorder %s46, %s60
    %p62 = scmp.eq.s32.totalorder %s15, 0
    %p63 = por %p61, %p62
    %s65 = sadd.s32 %s64, 1
    %p68 = scmp.eq.s32.totalorder %s9, 1
    %p69 = scmp.ne.s32.totalorder %s64, %s66
    %p70 = scmp.eq.s32.totalorder %s9, 0
    %p71 = por %p69, %p70
    %p72 = scmp.ne.s32.totalorder %s64, %s66
    %p73 = scmp.eq.s32.totalorder %s14, 1
    %p74 = por %p72, %p73
    %p75 = scmp.ne.s32.totalorder %s66, %s67
    %p76 = scmp.eq.s32.totalorder %s14, 0
    %p77 = por %p75, %p76
    %p78 = scmp.ne.s32.totalorder %s66, %s67
    %p79 = scmp.eq.s32.totalorder %s15, 1
    %p80 = por %p78, %p79
    %p82 = scmp.ne.s32.totalorder %s67, %s81
    %p83 = scmp.eq.s32.totalorder %s15, 0
    %p84 = por %p82, %p83
    %s85 = ssub.s32 %s9, %s16
    %p86 = scmp.eq.s32.totalorder %s85, 0
    %s88 = sadd.s32 %s87, 1
    %s89 = scalar_select %p86, %s87, %s88
    %p92 = pneg %p86
    %p93 = scmp.eq.s32.totalorder %s9, 1
    %p94 = por %p92, %p93
    %p95 = scmp.ne.s32.totalorder %s87, %s90
    %p96 = scmp.eq.s32.totalorder %s9, 0
    %p97 = por %p95, %p96
    %p98 = scmp.ne.s32.totalorder %s87, %s90
    %p99 = scmp.eq.s32.totalorder %s14, 1
    %p100 = por %p98, %p99
    %p101 = scmp.ne.s32.totalorder %s90, %s91
    %p102 = scmp.eq.s32.totalorder %s14, 0
    %p103 = por %p101, %p102
    %p104 = scmp.ne.s32.totalorder %s90, %s91
    %p105 = scmp.eq.s32.totalorder %s15, 1
    %p106 = por %p104, %p105
    %p108 = scmp.ne.s32.totalorder %s91, %s107
    %p109 = scmp.eq.s32.totalorder %s15, 0
    %p110 = por %p108, %p109
    %p111 = scmp.le.s32.totalorder 1, %s9
    %p112 = scmp.lt.s32.totalorder %s9, 3
    %p113 = pnand %p111, %p112
    %p114 = pneg %p113
    // Predicated region
    $region9: #{conv_bn_prelu.1} parent=5 // pred_check
      _
    $region10: #{conv_bn_prelu.1} parent=5 // pred_check_branch
      %116 = sbr.rel (%p113) target = $region12
    $region11: #{conv_bn_prelu.1} parent=5 // pred_region
      %s117 = ssub.s32 %s9, 1
      // Predicated region
      $region13: #{conv_bn_prelu.1} parent=11 // pred_check
        %p118 = pneg %p56
      $region14: #{conv_bn_prelu.1} parent=11 // pred_check_branch
        %120 = sbr.rel (%p118) target = $region16
      $region15: #{conv_bn_prelu.1} parent=11 // pred_region
        _
      $region16: #{conv_bn_prelu.1} parent=11 // pred_fallthru
        _
      // Predicated region
      $region17: #{conv_bn_prelu.1} parent=11 // pred_check
        %p121 = pneg %p77
      $region18: #{conv_bn_prelu.1} parent=11 // pred_check_branch
        %123 = sbr.rel (%p121) target = $region20
      $region19: #{conv_bn_prelu.1} parent=11 // pred_region
        _
      $region20: #{conv_bn_prelu.1} parent=11 // pred_fallthru
        _
    $region12: #{conv_bn_prelu.1} parent=5 // pred_fallthru
      _
    %p124 = scmp.lt.s32.totalorder %s9, 2
    // Predicated region
    $region21: #{conv_bn_prelu.1} parent=5 // pred_check
      %p125 = pneg %p124
    $region22: #{conv_bn_prelu.1} parent=5 // pred_check_branch
      %127 = sbr.rel (%p125) target = $region24
    $region23: #{conv_bn_prelu.1} parent=5 // pred_region
      // Predicated region
      $region25: #{conv_bn_prelu.1} parent=23 // pred_check
        %p128 = pneg %p29
      $region26: #{conv_bn_prelu.1} parent=23 // pred_check_branch
        %130 = sbr.rel (%p128) target = $region28
      $region27: #{conv_bn_prelu.1} parent=23 // pred_region
        %p131 = scmp.lt.s32.totalorder %s9, 1
        %s132 = scalar_select %p131, %s9, 1
        %s133 = smul.addr %s132, 5
        %s134 = smul.addr %s133, 2
        %s135 = scalar_lea.vmem %s0, %s134
      $region28: #{conv_bn_prelu.1} parent=23 // pred_fallthru
        _
    $region24: #{conv_bn_prelu.1} parent=5 // pred_fallthru
      _
    %p136 = scmp.le.s32.totalorder 1, %s9
    %p137 = scmp.lt.s32.totalorder %s9, 3
    %p138 = pnand %p136, %p137
    %p139 = pneg %p138
    // Predicated region
    $region29: #{conv_bn_prelu.1} parent=5 // pred_check
      _
    $region30: #{conv_bn_prelu.1} parent=5 // pred_check_branch
      %141 = sbr.rel (%p138) target = $region32
    $region31: #{conv_bn_prelu.1} parent=5 // pred_region
      %s142 = ssub.s32 %s9, 1
      %p143 = scmp.lt.s32.totalorder %s14, 1
      %s144 = scalar_select %p143, %s14, 1
      %s145 = smul.addr %s144, 5
      %s146 = smul.addr %s145, 2
      %s147 = scalar_lea.vmem %s0, %s146
      %p148 = pneg %p35
      %p149 = pneg %p32
      %p150 = pneg %p56
      %p151 = pneg %p53
      %p152 = pneg %p77
      %p153 = pneg %p74
      %p154 = pneg %p103
      %p155 = pneg %p100
      %p156 = scmp.lt.s32.totalorder %s14, 1
      %s157 = scalar_select %p156, %s14, 1
      %s158 = smul.addr %s157, 3
      %s159 = smul.addr %s158, 8
      %s160 = scalar_lea.vmem %s3, %s159
      %p161 = scmp.lt.s32.totalorder %s14, 1
      %s162 = scalar_select %p161, %s14, 1
      %s163 = smul.addr %s162, 5
      %s164 = smul.addr %s163, 2
      %s165 = scalar_lea.vmem %s0, %s164
      %p166 = scmp.lt.s32.totalorder %s14, 1
      %s167 = scalar_select %p166, %s14, 1
      %s168 = smul.addr %s167, 3
      %s169 = smul.addr %s168, 8
      %s170 = scalar_lea.vmem %s3, %s169
      %v172 = vld [vmem:[%s165] sm:$0x3f]
      %v173 = vld [vmem:[%s1] sm:$0xf]
      %v174 = vld [vmem:[%s165] sm:$0xff]
      %s175 = scalar_lea.vmem %s1, 4
      %v176 = vld [vmem:[%s175] sm:$0xf]
      %v178 = vcombine.high %v174, %v174
      %v180 = vunpack.c.l.s4 1983009808
      %v181 = vunpack.c.0.s8 %v180
      %v182 = vlaneseq
      %v183 = vshrl.u32 %v182, 7
      %v184 = vsub.s32 %v181, %v183
      %v185 = vrot.slane %v174, %v184
      %v187 = vunpack.c.l.s4 1983009808
      %v188 = vunpack.c.0.s8 %v187
      %v189 = vlaneseq
      %v190 = vshrl.u32 %v189, 7
      %v191 = vsub.s32 %v188, %v190
      %v192 = vrot.slane %v178, %v191
      %v193 = vcombine.high %v185, %v185
      %v194 = vcombine.high %v192, %v192
      %195 = vrot.lane.b32.xlu0 %v185, 127
      %v196 = vpop.permute.xlu0 %195
      %197 = vrot.lane.b32.xlu0 %v193, 127
      %v198 = vpop.permute.xlu0 %197
      %199 = vrot.lane.b32.xlu0 %v192, 127
      %v200 = vpop.permute.xlu0 %199
      %201 = vrot.lane.b32.xlu0 %v194, 127
      %v202 = vpop.permute.xlu0 %201
      %vm203 = vcmask 1039360
      %v204 = vsel %vm203, %v196, %v198
      %v205 = vsel %vm203, %v198, %v200
      %v206 = vsel %vm203, %v200, %v202
      %vm207 = vcmask 31744
      %v209 = vsel %vm207, %v176, 0
      %vm211 = vcmask 1041408
      %v213 = vsel %vm211, %v204, 0
      %v216 = vsel %vm211, %v205, 0
      %v219 = vsel %vm211, %v206, 0
      %221 = vmatprep.subr.bf16.mxu0 0
      %222 = vmatpush1.bf16.msra.mxu0 0
      %223 = vmatprep.subr.bf16.mxu0 0
      %224 = vmatpush1.bf16.msra.mxu0 0
      %225 = vmatprep.subr.bf16.mxu0 0
      %226 = vmatpush1.bf16.msra.mxu0 0
      %227 = vmatprep.subr.bf16.mxu0 0
      %228 = vmatpush1.bf16.msra.mxu0 0
      %229 = vmatprep.subr.bf16.mxu0 0
      %230 = vmatpush1.bf16.msra.mxu0 0
      %231 = vmatprep.subr.bf16.mxu0 0
      %232 = vmatpush1.bf16.msra.mxu0 0
      %233 = vmatprep.subr.bf16.mxu0 0
      %234 = vmatpush1.bf16.msra.mxu0 0
      %235 = vmatprep.subr.bf16.mxu0 %v216
      %236 = vmatpush1.bf16.msra.mxu0 %v213
      %237 = vmatprep.subr.bf16.mxu0 0
      %238 = vmatpush2.bf16.msra.mxu0 0
      %239 = vmatprep.subr.bf16.mxu0 0
      %240 = vmatpush2.bf16.msra.mxu0 0
      %241 = vmatprep.subr.bf16.mxu0 0
      %242 = vmatpush2.bf16.msra.mxu0 0
      %243 = vmatprep.subr.bf16.mxu0 0
      %244 = vmatpush2.bf16.msra.mxu0 0
      %245 = vmatprep.subr.bf16.mxu0 0
      %246 = vmatpush2.bf16.msra.mxu0 0
      %247 = vmatprep.subr.bf16.mxu0 0
      %248 = vmatpush2.bf16.msra.mxu0 0
      %249 = vmatprep.subr.bf16.mxu0 0
      %250 = vmatpush2.bf16.msra.mxu0 0
      %251 = vmatprep.subr.bf16.mxu0 0
      %252 = vmatpush2.bf16.msra.mxu0 0
      %253 = vmatprep.mubr.bf16.mxu0 0
      %254 = vmatmul.mubr.bf16.gmra.mxu0 %v209
      %v255 = vpop.f32.mrf.mxu0
      %v256 = vadd.f32 0.0, %v255
      %v257 = vpop.f32.mrf.mxu0
      %v258 = vadd.f32 0.0, %v257
      %v259 = vpop.f32.mrf.mxu0
      %v260 = vpop.f32.mrf.mxu0
      %261 = vdwg.mxu0
      %262 = vmatprep.subr.bf16.mxu0 0
      %263 = vmatpush1.bf16.msra.mxu0 0
      %264 = vmatprep.subr.bf16.mxu0 0
      %265 = vmatpush1.bf16.msra.mxu0 0
      %266 = vmatprep.subr.bf16.mxu0 0
      %267 = vmatpush1.bf16.msra.mxu0 0
      %268 = vmatprep.subr.bf16.mxu0 0
      %269 = vmatpush1.bf16.msra.mxu0 0
      %270 = vmatprep.subr.bf16.mxu0 0
      %271 = vmatpush1.bf16.msra.mxu0 0
      %272 = vmatprep.subr.bf16.mxu0 0
      %273 = vmatpush1.bf16.msra.mxu0 0
      %274 = vmatprep.subr.bf16.mxu0 0
      %275 = vmatpush1.bf16.msra.mxu0 0
      %276 = vmatprep.subr.bf16.mxu0 0
      %277 = vmatpush1.bf16.msra.mxu0 %v219
      %278 = vmatprep.subr.bf16.mxu0 0
      %279 = vmatpush2.bf16.msra.mxu0 0
      %280 = vmatprep.subr.bf16.mxu0 0
      %281 = vmatpush2.bf16.msra.mxu0 0
      %282 = vmatprep.subr.bf16.mxu0 0
      %283 = vmatpush2.bf16.msra.mxu0 0
      %284 = vmatprep.subr.bf16.mxu0 0
      %285 = vmatpush2.bf16.msra.mxu0 0
      %286 = vmatprep.subr.bf16.mxu0 0
      %287 = vmatpush2.bf16.msra.mxu0 0
      %288 = vmatprep.subr.bf16.mxu0 0
      %289 = vmatpush2.bf16.msra.mxu0 0
      %290 = vmatprep.subr.bf16.mxu0 0
      %291 = vmatpush2.bf16.msra.mxu0 0
      %292 = vmatprep.subr.bf16.mxu0 0
      %293 = vmatpush2.bf16.msra.mxu0 0
      %294 = vmatprep.mubr.bf16.mxu0 0
      %295 = vmatmul.mubr.bf16.gmra.mxu0 %v209
      %v296 = vpop.f32.mrf.mxu0
      %v297 = vadd.f32 0.0, %v296
      %v298 = vpop.f32.mrf.mxu0
      %v299 = vpop.f32.mrf.mxu0
      %v300 = vpop.f32.mrf.mxu0
      %301 = vdwg.mxu0
      %v303 = vcombine.high %v172, %v172
      %v305 = vunpack.c.l.s4 1983009808
      %v306 = vunpack.c.0.s8 %v305
      %v307 = vlaneseq
      %v308 = vshrl.u32 %v307, 7
      %v309 = vsub.s32 %v306, %v308
      %v310 = vrot.slane %v172, %v309
      %v312 = vunpack.c.l.s4 1983009808
      %v313 = vunpack.c.0.s8 %v312
      %v314 = vlaneseq
      %v315 = vshrl.u32 %v314, 7
      %v316 = vsub.s32 %v313, %v315
      %v317 = vrot.slane %v303, %v316
      %v318 = vcombine.high %v310, %v310
      %v320 = vsel %vm207, %v173, 0
      %v323 = vsel %vm211, %v310, 0
      %v326 = vsel %vm211, %v318, 0
      %v329 = vsel %vm211, %v317, 0
      %331 = vmatprep.subr.bf16.mxu0 0
      %332 = vmatpush1.bf16.msra.mxu0 0
      %333 = vmatprep.subr.bf16.mxu0 0
      %334 = vmatpush1.bf16.msra.mxu0 0
      %335 = vmatprep.subr.bf16.mxu0 0
      %336 = vmatpush1.bf16.msra.mxu0 0
      %337 = vmatprep.subr.bf16.mxu0 0
      %338 = vmatpush1.bf16.msra.mxu0 0
      %339 = vmatprep.subr.bf16.mxu0 0
      %340 = vmatpush1.bf16.msra.mxu0 0
      %341 = vmatprep.subr.bf16.mxu0 0
      %342 = vmatpush1.bf16.msra.mxu0 0
      %343 = vmatprep.subr.bf16.mxu0 0
      %344 = vmatpush1.bf16.msra.mxu0 0
      %345 = vmatprep.subr.bf16.mxu0 %v326
      %346 = vmatpush1.bf16.msra.mxu0 %v323
      %347 = vmatprep.subr.bf16.mxu0 0
      %348 = vmatpush2.bf16.msra.mxu0 0
      %349 = vmatprep.subr.bf16.mxu0 0
      %350 = vmatpush2.bf16.msra.mxu0 0
      %351 = vmatprep.subr.bf16.mxu0 0
      %352 = vmatpush2.bf16.msra.mxu0 0
      %353 = vmatprep.subr.bf16.mxu0 0
      %354 = vmatpush2.bf16.msra.mxu0 0
      %355 = vmatprep.subr.bf16.mxu0 0
      %356 = vmatpush2.bf16.msra.mxu0 0
      %357 = vmatprep.subr.bf16.mxu0 0
      %358 = vmatpush2.bf16.msra.mxu0 0
      %359 = vmatprep.subr.bf16.mxu0 0
      %360 = vmatpush2.bf16.msra.mxu0 0
      %361 = vmatprep.subr.bf16.mxu0 0
      %362 = vmatpush2.bf16.msra.mxu0 0
      %363 = vmatprep.mubr.bf16.mxu0 0
      %364 = vmatmul.mubr.bf16.gmra.mxu0 %v320
      %v365 = vpop.f32.mrf.mxu0
      %v366 = vadd.f32 %v256, %v365
      %v367 = vpop.f32.mrf.mxu0
      %v368 = vadd.f32 %v258, %v367
      %v369 = vpop.f32.mrf.mxu0
      %v370 = vpop.f32.mrf.mxu0
      %371 = vdwg.mxu0
      %372 = vmatprep.subr.bf16.mxu0 0
      %373 = vmatpush1.bf16.msra.mxu0 0
      %374 = vmatprep.subr.bf16.mxu0 0
      %375 = vmatpush1.bf16.msra.mxu0 0
      %376 = vmatprep.subr.bf16.mxu0 0
      %377 = vmatpush1.bf16.msra.mxu0 0
      %378 = vmatprep.subr.bf16.mxu0 0
      %379 = vmatpush1.bf16.msra.mxu0 0
      %380 = vmatprep.subr.bf16.mxu0 0
      %381 = vmatpush1.bf16.msra.mxu0 0
      %382 = vmatprep.subr.bf16.mxu0 0
      %383 = vmatpush1.bf16.msra.mxu0 0
      %384 = vmatprep.subr.bf16.mxu0 0
      %385 = vmatpush1.bf16.msra.mxu0 0
      %386 = vmatprep.subr.bf16.mxu0 0
      %387 = vmatpush1.bf16.msra.mxu0 %v329
      %388 = vmatprep.subr.bf16.mxu0 0
      %389 = vmatpush2.bf16.msra.mxu0 0
      %390 = vmatprep.subr.bf16.mxu0 0
      %391 = vmatpush2.bf16.msra.mxu0 0
      %392 = vmatprep.subr.bf16.mxu0 0
      %393 = vmatpush2.bf16.msra.mxu0 0
      %394 = vmatprep.subr.bf16.mxu0 0
      %395 = vmatpush2.bf16.msra.mxu0 0
      %396 = vmatprep.subr.bf16.mxu0 0
      %397 = vmatpush2.bf16.msra.mxu0 0
      %398 = vmatprep.subr.bf16.mxu0 0
      %399 = vmatpush2.bf16.msra.mxu0 0
      %400 = vmatprep.subr.bf16.mxu0 0
      %401 = vmatpush2.bf16.msra.mxu0 0
      %402 = vmatprep.subr.bf16.mxu0 0
      %403 = vmatpush2.bf16.msra.mxu0 0
      %404 = vmatprep.mubr.bf16.mxu0 0
      %405 = vmatmul.mubr.bf16.gmra.mxu0 %v320
      %v406 = vpop.f32.mrf.mxu0
      %v407 = vadd.f32 %v297, %v406
      %v408 = vpop.f32.mrf.mxu0
      %v409 = vpop.f32.mrf.mxu0
      %v410 = vpop.f32.mrf.mxu0
      %411 = vdwg.mxu0
      %v412 = vld [vmem:[%s165] sm:$0xff]
      %s413 = scalar_lea.vmem %s1, 8
      %v414 = vld [vmem:[%s413] sm:$0xf]
      %v416 = vcombine.high %v412, %v412
      %v418 = vunpack.c.l.s4 1983009808
      %v419 = vunpack.c.0.s8 %v418
      %v420 = vlaneseq
      %v421 = vshrl.u32 %v420, 7
      %v422 = vsub.s32 %v419, %v421
      %v423 = vrot.slane %v412, %v422
      %v425 = vunpack.c.l.s4 1983009808
      %v426 = vunpack.c.0.s8 %v425
      %v427 = vlaneseq
      %v428 = vshrl.u32 %v427, 7
      %v429 = vsub.s32 %v426, %v428
      %v430 = vrot.slane %v416, %v429
      %v431 = vcombine.high %v423, %v423
      %v432 = vcombine.high %v430, %v430
      %433 = vrot.lane.b32.xlu0 %v423, 126
      %v434 = vpop.permute.xlu0 %433
      %435 = vrot.lane.b32.xlu0 %v431, 126
      %v436 = vpop.permute.xlu0 %435
      %437 = vrot.lane.b32.xlu0 %v430, 126
      %v438 = vpop.permute.xlu0 %437
      %439 = vrot.lane.b32.xlu0 %v432, 126
      %v440 = vpop.permute.xlu0 %439
      %vm441 = vcmask 1031168
      %v442 = vsel %vm441, %v434, %v436
      %v443 = vsel %vm441, %v436, %v438
      %v444 = vsel %vm441, %v438, %v440
      %v446 = vsel %vm207, %v414, 0
      %v449 = vsel %vm211, %v442, 0
      %v452 = vsel %vm211, %v443, 0
      %v455 = vsel %vm211, %v444, 0
      %457 = vmatprep.subr.bf16.mxu0 0
      %458 = vmatpush1.bf16.msra.mxu0 0
      %459 = vmatprep.subr.bf16.mxu0 0
      %460 = vmatpush1.bf16.msra.mxu0 0
      %461 = vmatprep.subr.bf16.mxu0 0
      %462 = vmatpush1.bf16.msra.mxu0 0
      %463 = vmatprep.subr.bf16.mxu0 0
      %464 = vmatpush1.bf16.msra.mxu0 0
      %465 = vmatprep.subr.bf16.mxu0 0
      %466 = vmatpush1.bf16.msra.mxu0 0
      %467 = vmatprep.subr.bf16.mxu0 0
      %468 = vmatpush1.bf16.msra.mxu0 0
      %469 = vmatprep.subr.bf16.mxu0 0
      %470 = vmatpush1.bf16.msra.mxu0 0
      %471 = vmatprep.subr.bf16.mxu0 %v452
      %472 = vmatpush1.bf16.msra.mxu0 %v449
      %473 = vmatprep.subr.bf16.mxu0 0
      %474 = vmatpush2.bf16.msra.mxu0 0
      %475 = vmatprep.subr.bf16.mxu0 0
      %476 = vmatpush2.bf16.msra.mxu0 0
      %477 = vmatprep.subr.bf16.mxu0 0
      %478 = vmatpush2.bf16.msra.mxu0 0
      %479 = vmatprep.subr.bf16.mxu0 0
      %480 = vmatpush2.bf16.msra.mxu0 0
      %481 = vmatprep.subr.bf16.mxu0 0
      %482 = vmatpush2.bf16.msra.mxu0 0
      %483 = vmatprep.subr.bf16.mxu0 0
      %484 = vmatpush2.bf16.msra.mxu0 0
      %485 = vmatprep.subr.bf16.mxu0 0
      %486 = vmatpush2.bf16.msra.mxu0 0
      %487 = vmatprep.subr.bf16.mxu0 0
      %488 = vmatpush2.bf16.msra.mxu0 0
      %489 = vmatprep.mubr.bf16.mxu0 0
      %490 = vmatmul.mubr.bf16.gmra.mxu0 %v446
      %v491 = vpop.f32.mrf.mxu0
      %v492 = vadd.f32 0.0, %v491
      %v493 = vpop.f32.mrf.mxu0
      %v494 = vadd.f32 0.0, %v493
      %v495 = vpop.f32.mrf.mxu0
      %v496 = vpop.f32.mrf.mxu0
      %497 = vdwg.mxu0
      %498 = vmatprep.subr.bf16.mxu0 0
      %499 = vmatpush1.bf16.msra.mxu0 0
      %500 = vmatprep.subr.bf16.mxu0 0
      %501 = vmatpush1.bf16.msra.mxu0 0
      %502 = vmatprep.subr.bf16.mxu0 0
      %503 = vmatpush1.bf16.msra.mxu0 0
      %504 = vmatprep.subr.bf16.mxu0 0
      %505 = vmatpush1.bf16.msra.mxu0 0
      %506 = vmatprep.subr.bf16.mxu0 0
      %507 = vmatpush1.bf16.msra.mxu0 0
      %508 = vmatprep.subr.bf16.mxu0 0
      %509 = vmatpush1.bf16.msra.mxu0 0
      %510 = vmatprep.subr.bf16.mxu0 0
      %511 = vmatpush1.bf16.msra.mxu0 0
      %512 = vmatprep.subr.bf16.mxu0 0
      %513 = vmatpush1.bf16.msra.mxu0 %v455
      %514 = vmatprep.subr.bf16.mxu0 0
      %515 = vmatpush2.bf16.msra.mxu0 0
      %516 = vmatprep.subr.bf16.mxu0 0
      %517 = vmatpush2.bf16.msra.mxu0 0
      %518 = vmatprep.subr.bf16.mxu0 0
      %519 = vmatpush2.bf16.msra.mxu0 0
      %520 = vmatprep.subr.bf16.mxu0 0
      %521 = vmatpush2.bf16.msra.mxu0 0
      %522 = vmatprep.subr.bf16.mxu0 0
      %523 = vmatpush2.bf16.msra.mxu0 0
      %524 = vmatprep.subr.bf16.mxu0 0
      %525 = vmatpush2.bf16.msra.mxu0 0
      %526 = vmatprep.subr.bf16.mxu0 0
      %527 = vmatpush2.bf16.msra.mxu0 0
      %528 = vmatprep.subr.bf16.mxu0 0
      %529 = vmatpush2.bf16.msra.mxu0 0
      %530 = vmatprep.mubr.bf16.mxu0 0
      %531 = vmatmul.mubr.bf16.gmra.mxu0 %v446
      %v532 = vpop.f32.mrf.mxu0
      %v533 = vadd.f32 0.0, %v532
      %v534 = vpop.f32.mrf.mxu0
      %v535 = vpop.f32.mrf.mxu0
      %v536 = vpop.f32.mrf.mxu0
      %537 = vdwg.mxu0
      %v538 = vadd.f32 %v366, %v492
      %v539 = vadd.f32 %v368, %v494
      %v540 = vadd.f32 %v407, %v533
      %v541 = vld [vmem:[%s165] sm:$0xff]
      %s542 = scalar_lea.vmem %s1, 12
      %v543 = vld [vmem:[%s542] sm:$0xf]
      %v545 = vcombine.high %v541, %v541
      %v547 = vunpack.c.l.s4 1983009808
      %v548 = vunpack.c.0.s8 %v547
      %v549 = vlaneseq
      %v550 = vshrl.u32 %v549, 7
      %v551 = vsub.s32 %v548, %v550
      %v552 = vrot.slane %v541, %v551
      %v554 = vunpack.c.l.s4 1983009808
      %v555 = vunpack.c.0.s8 %v554
      %v556 = vlaneseq
      %v557 = vshrl.u32 %v556, 7
      %v558 = vsub.s32 %v555, %v557
      %v559 = vrot.slane %v545, %v558
      %v560 = vcombine.high %v552, %v552
      %v561 = vcombine.high %v559, %v559
      %562 = vrot.lane.b32.xlu0 %v552, 110
      %v563 = vpop.permute.xlu0 %562
      %564 = vrot.lane.b32.xlu0 %v560, 110
      %v565 = vpop.permute.xlu0 %564
      %566 = vrot.lane.b32.xlu0 %v559, 110
      %v567 = vpop.permute.xlu0 %566
      %568 = vrot.lane.b32.xlu0 %v561, 110
      %v569 = vpop.permute.xlu0 %568
      %vm570 = vcmask 900096
      %v571 = vsel %vm570, %v563, %v565
      %v572 = vsel %vm570, %v565, %v567
      %v573 = vsel %vm570, %v567, %v569
      %v575 = vsel %vm207, %v543, 0
      %v578 = vsel %vm211, %v571, 0
      %v581 = vsel %vm211, %v572, 0
      %v584 = vsel %vm211, %v573, 0
      %586 = vmatprep.subr.bf16.mxu0 0
      %587 = vmatpush1.bf16.msra.mxu0 0
      %588 = vmatprep.subr.bf16.mxu0 0
      %589 = vmatpush1.bf16.msra.mxu0 0
      %590 = vmatprep.subr.bf16.mxu0 0
      %591 = vmatpush1.bf16.msra.mxu0 0
      %592 = vmatprep.subr.bf16.mxu0 0
      %593 = vmatpush1.bf16.msra.mxu0 0
      %594 = vmatprep.subr.bf16.mxu0 0
      %595 = vmatpush1.bf16.msra.mxu0 0
      %596 = vmatprep.subr.bf16.mxu0 0
      %597 = vmatpush1.bf16.msra.mxu0 0
      %598 = vmatprep.subr.bf16.mxu0 0
      %599 = vmatpush1.bf16.msra.mxu0 0
      %600 = vmatprep.subr.bf16.mxu0 %v581
      %601 = vmatpush1.bf16.msra.mxu0 %v578
      %602 = vmatprep.subr.bf16.mxu0 0
      %603 = vmatpush2.bf16.msra.mxu0 0
      %604 = vmatprep.subr.bf16.mxu0 0
      %605 = vmatpush2.bf16.msra.mxu0 0
      %606 = vmatprep.subr.bf16.mxu0 0
      %607 = vmatpush2.bf16.msra.mxu0 0
      %608 = vmatprep.subr.bf16.mxu0 0
      %609 = vmatpush2.bf16.msra.mxu0 0
      %610 = vmatprep.subr.bf16.mxu0 0
      %611 = vmatpush2.bf16.msra.mxu0 0
      %612 = vmatprep.subr.bf16.mxu0 0
      %613 = vmatpush2.bf16.msra.mxu0 0
      %614 = vmatprep.subr.bf16.mxu0 0
      %615 = vmatpush2.bf16.msra.mxu0 0
      %616 = vmatprep.subr.bf16.mxu0 0
      %617 = vmatpush2.bf16.msra.mxu0 0
      %618 = vmatprep.mubr.bf16.mxu0 0
      %619 = vmatmul.mubr.bf16.gmra.mxu0 %v575
      %v620 = vpop.f32.mrf.mxu0
      %v621 = vadd.f32 0.0, %v620
      %v622 = vpop.f32.mrf.mxu0
      %v623 = vadd.f32 0.0, %v622
      %v624 = vpop.f32.mrf.mxu0
      %v625 = vpop.f32.mrf.mxu0
      %626 = vdwg.mxu0
      %627 = vmatprep.subr.bf16.mxu0 0
      %628 = vmatpush1.bf16.msra.mxu0 0
      %629 = vmatprep.subr.bf16.mxu0 0
      %630 = vmatpush1.bf16.msra.mxu0 0
      %631 = vmatprep.subr.bf16.mxu0 0
      %632 = vmatpush1.bf16.msra.mxu0 0
      %633 = vmatprep.subr.bf16.mxu0 0
      %634 = vmatpush1.bf16.msra.mxu0 0
      %635 = vmatprep.subr.bf16.mxu0 0
      %636 = vmatpush1.bf16.msra.mxu0 0
      %637 = vmatprep.subr.bf16.mxu0 0
      %638 = vmatpush1.bf16.msra.mxu0 0
      %639 = vmatprep.subr.bf16.mxu0 0
      %640 = vmatpush1.bf16.msra.mxu0 0
      %641 = vmatprep.subr.bf16.mxu0 0
      %642 = vmatpush1.bf16.msra.mxu0 %v584
      %643 = vmatprep.subr.bf16.mxu0 0
      %644 = vmatpush2.bf16.msra.mxu0 0
      %645 = vmatprep.subr.bf16.mxu0 0
      %646 = vmatpush2.bf16.msra.mxu0 0
      %647 = vmatprep.subr.bf16.mxu0 0
      %648 = vmatpush2.bf16.msra.mxu0 0
      %649 = vmatprep.subr.bf16.mxu0 0
      %650 = vmatpush2.bf16.msra.mxu0 0
      %651 = vmatprep.subr.bf16.mxu0 0
      %652 = vmatpush2.bf16.msra.mxu0 0
      %653 = vmatprep.subr.bf16.mxu0 0
      %654 = vmatpush2.bf16.msra.mxu0 0
      %655 = vmatprep.subr.bf16.mxu0 0
      %656 = vmatpush2.bf16.msra.mxu0 0
      %657 = vmatprep.subr.bf16.mxu0 0
      %658 = vmatpush2.bf16.msra.mxu0 0
      %659 = vmatprep.mubr.bf16.mxu0 0
      %660 = vmatmul.mubr.bf16.gmra.mxu0 %v575
      %v661 = vpop.f32.mrf.mxu0
      %v662 = vadd.f32 0.0, %v661
      %v663 = vpop.f32.mrf.mxu0
      %v664 = vpop.f32.mrf.mxu0
      %v665 = vpop.f32.mrf.mxu0
      %666 = vdwg.mxu0
      %v667 = vadd.f32 %v538, %v621
      %v668 = vadd.f32 %v539, %v623
      %v669 = vadd.f32 %v540, %v662
      %v670 = vld [vmem:[%s165] sm:$0xff]
      %s671 = scalar_lea.vmem %s1, 16
      %v672 = vld [vmem:[%s671] sm:$0xf]
      %v674 = vcombine.high %v670, %v670
      %v676 = vunpack.c.l.s4 1983009808
      %v677 = vunpack.c.0.s8 %v676
      %v678 = vlaneseq
      %v679 = vshrl.u32 %v678, 7
      %v680 = vsub.s32 %v677, %v679
      %v681 = vrot.slane %v670, %v680
      %v683 = vunpack.c.l.s4 1983009808
      %v684 = vunpack.c.0.s8 %v683
      %v685 = vlaneseq
      %v686 = vshrl.u32 %v685, 7
      %v687 = vsub.s32 %v684, %v686
      %v688 = vrot.slane %v674, %v687
      %v689 = vcombine.high %v681, %v681
      %v690 = vcombine.high %v688, %v688
      %691 = vrot.lane.b32.xlu0 %v681, 109
      %v692 = vpop.permute.xlu0 %691
      %693 = vrot.lane.b32.xlu0 %v689, 109
      %v694 = vpop.permute.xlu0 %693
      %695 = vrot.lane.b32.xlu0 %v688, 109
      %v696 = vpop.permute.xlu0 %695
      %697 = vrot.lane.b32.xlu0 %v690, 109
      %v698 = vpop.permute.xlu0 %697
      %vm699 = vcmask 891904
      %v700 = vsel %vm699, %v692, %v694
      %v701 = vsel %vm699, %v694, %v696
      %v702 = vsel %vm699, %v696, %v698
      %v704 = vsel %vm207, %v672, 0
      %v707 = vsel %vm211, %v700, 0
      %v710 = vsel %vm211, %v701, 0
      %v713 = vsel %vm211, %v702, 0
      %715 = vmatprep.subr.bf16.mxu0 0
      %716 = vmatpush1.bf16.msra.mxu0 0
      %717 = vmatprep.subr.bf16.mxu0 0
      %718 = vmatpush1.bf16.msra.mxu0 0
      %719 = vmatprep.subr.bf16.mxu0 0
      %720 = vmatpush1.bf16.msra.mxu0 0
      %721 = vmatprep.subr.bf16.mxu0 0
      %722 = vmatpush1.bf16.msra.mxu0 0
      %723 = vmatprep.subr.bf16.mxu0 0
      %724 = vmatpush1.bf16.msra.mxu0 0
      %725 = vmatprep.subr.bf16.mxu0 0
      %726 = vmatpush1.bf16.msra.mxu0 0
      %727 = vmatprep.subr.bf16.mxu0 0
      %728 = vmatpush1.bf16.msra.mxu0 0
      %729 = vmatprep.subr.bf16.mxu0 %v710
      %730 = vmatpush1.bf16.msra.mxu0 %v707
      %731 = vmatprep.subr.bf16.mxu0 0
      %732 = vmatpush2.bf16.msra.mxu0 0
      %733 = vmatprep.subr.bf16.mxu0 0
      %734 = vmatpush2.bf16.msra.mxu0 0
      %735 = vmatprep.subr.bf16.mxu0 0
      %736 = vmatpush2.bf16.msra.mxu0 0
      %737 = vmatprep.subr.bf16.mxu0 0
      %738 = vmatpush2.bf16.msra.mxu0 0
      %739 = vmatprep.subr.bf16.mxu0 0
      %740 = vmatpush2.bf16.msra.mxu0 0
      %741 = vmatprep.subr.bf16.mxu0 0
      %742 = vmatpush2.bf16.msra.mxu0 0
      %743 = vmatprep.subr.bf16.mxu0 0
      %744 = vmatpush2.bf16.msra.mxu0 0
      %745 = vmatprep.subr.bf16.mxu0 0
      %746 = vmatpush2.bf16.msra.mxu0 0
      %747 = vmatprep.mubr.bf16.mxu0 0
      %748 = vmatmul.mubr.bf16.gmra.mxu0 %v704
      %v749 = vpop.f32.mrf.mxu0
      %v750 = vadd.f32 0.0, %v749
      %v751 = vpop.f32.mrf.mxu0
      %v752 = vadd.f32 0.0, %v751
      %v753 = vpop.f32.mrf.mxu0
      %v754 = vpop.f32.mrf.mxu0
      %755 = vdwg.mxu0
      %756 = vmatprep.subr.bf16.mxu0 0
      %757 = vmatpush1.bf16.msra.mxu0 0
      %758 = vmatprep.subr.bf16.mxu0 0
      %759 = vmatpush1.bf16.msra.mxu0 0
      %760 = vmatprep.subr.bf16.mxu0 0
      %761 = vmatpush1.bf16.msra.mxu0 0
      %762 = vmatprep.subr.bf16.mxu0 0
      %763 = vmatpush1.bf16.msra.mxu0 0
      %764 = vmatprep.subr.bf16.mxu0 0
      %765 = vmatpush1.bf16.msra.mxu0 0
      %766 = vmatprep.subr.bf16.mxu0 0
      %767 = vmatpush1.bf16.msra.mxu0 0
      %768 = vmatprep.subr.bf16.mxu0 0
      %769 = vmatpush1.bf16.msra.mxu0 0
      %770 = vmatprep.subr.bf16.mxu0 0
      %771 = vmatpush1.bf16.msra.mxu0 %v713
      %772 = vmatprep.subr.bf16.mxu0 0
      %773 = vmatpush2.bf16.msra.mxu0 0
      %774 = vmatprep.subr.bf16.mxu0 0
      %775 = vmatpush2.bf16.msra.mxu0 0
      %776 = vmatprep.subr.bf16.mxu0 0
      %777 = vmatpush2.bf16.msra.mxu0 0
      %778 = vmatprep.subr.bf16.mxu0 0
      %779 = vmatpush2.bf16.msra.mxu0 0
      %780 = vmatprep.subr.bf16.mxu0 0
      %781 = vmatpush2.bf16.msra.mxu0 0
      %782 = vmatprep.subr.bf16.mxu0 0
      %783 = vmatpush2.bf16.msra.mxu0 0
      %784 = vmatprep.subr.bf16.mxu0 0
      %785 = vmatpush2.bf16.msra.mxu0 0
      %786 = vmatprep.subr.bf16.mxu0 0
      %787 = vmatpush2.bf16.msra.mxu0 0
      %788 = vmatprep.mubr.bf16.mxu0 0
      %789 = vmatmul.mubr.bf16.gmra.mxu0 %v704
      %v790 = vpop.f32.mrf.mxu0
      %v791 = vadd.f32 0.0, %v790
      %v792 = vpop.f32.mrf.mxu0
      %v793 = vpop.f32.mrf.mxu0
      %v794 = vpop.f32.mrf.mxu0
      %795 = vdwg.mxu0
      %v796 = vadd.f32 %v667, %v750
      %v797 = vadd.f32 %v668, %v752
      %v798 = vadd.f32 %v669, %v791
      %v799 = vld [vmem:[%s165] sm:$0xff]
      %s800 = scalar_lea.vmem %s1, 20
      %v801 = vld [vmem:[%s800] sm:$0xf]
      %v803 = vcombine.high %v799, %v799
      %v805 = vunpack.c.l.s4 1983009808
      %v806 = vunpack.c.0.s8 %v805
      %v807 = vlaneseq
      %v808 = vshrl.u32 %v807, 7
      %v809 = vsub.s32 %v806, %v808
      %v810 = vrot.slane %v799, %v809
      %v812 = vunpack.c.l.s4 1983009808
      %v813 = vunpack.c.0.s8 %v812
      %v814 = vlaneseq
      %v815 = vshrl.u32 %v814, 7
      %v816 = vsub.s32 %v813, %v815
      %v817 = vrot.slane %v803, %v816
      %v818 = vcombine.high %v810, %v810
      %v819 = vcombine.high %v817, %v817
      %820 = vrot.lane.b32.xlu0 %v810, 108
      %v821 = vpop.permute.xlu0 %820
      %822 = vrot.lane.b32.xlu0 %v818, 108
      %v823 = vpop.permute.xlu0 %822
      %824 = vrot.lane.b32.xlu0 %v817, 108
      %v825 = vpop.permute.xlu0 %824
      %826 = vrot.lane.b32.xlu0 %v819, 108
      %v827 = vpop.permute.xlu0 %826
      %vm828 = vcmask 883712
      %v829 = vsel %vm828, %v821, %v823
      %v830 = vsel %vm828, %v823, %v825
      %v831 = vsel %vm828, %v825, %v827
      %v833 = vsel %vm207, %v801, 0
      %v836 = vsel %vm211, %v829, 0
      %v839 = vsel %vm211, %v830, 0
      %v842 = vsel %vm211, %v831, 0
      %844 = vmatprep.subr.bf16.mxu0 0
      %845 = vmatpush1.bf16.msra.mxu0 0
      %846 = vmatprep.subr.bf16.mxu0 0
      %847 = vmatpush1.bf16.msra.mxu0 0
      %848 = vmatprep.subr.bf16.mxu0 0
      %849 = vmatpush1.bf16.msra.mxu0 0
      %850 = vmatprep.subr.bf16.mxu0 0
      %851 = vmatpush1.bf16.msra.mxu0 0
      %852 = vmatprep.subr.bf16.mxu0 0
      %853 = vmatpush1.bf16.msra.mxu0 0
      %854 = vmatprep.subr.bf16.mxu0 0
      %855 = vmatpush1.bf16.msra.mxu0 0
      %856 = vmatprep.subr.bf16.mxu0 0
      %857 = vmatpush1.bf16.msra.mxu0 0
      %858 = vmatprep.subr.bf16.mxu0 %v839
      %859 = vmatpush1.bf16.msra.mxu0 %v836
      %860 = vmatprep.subr.bf16.mxu0 0
      %861 = vmatpush2.bf16.msra.mxu0 0
      %862 = vmatprep.subr.bf16.mxu0 0
      %863 = vmatpush2.bf16.msra.mxu0 0
      %864 = vmatprep.subr.bf16.mxu0 0
      %865 = vmatpush2.bf16.msra.mxu0 0
      %866 = vmatprep.subr.bf16.mxu0 0
      %867 = vmatpush2.bf16.msra.mxu0 0
      %868 = vmatprep.subr.bf16.mxu0 0
      %869 = vmatpush2.bf16.msra.mxu0 0
      %870 = vmatprep.subr.bf16.mxu0 0
      %871 = vmatpush2.bf16.msra.mxu0 0
      %872 = vmatprep.subr.bf16.mxu0 0
      %873 = vmatpush2.bf16.msra.mxu0 0
      %874 = vmatprep.subr.bf16.mxu0 0
      %875 = vmatpush2.bf16.msra.mxu0 0
      %876 = vmatprep.mubr.bf16.mxu0 0
      %877 = vmatmul.mubr.bf16.gmra.mxu0 %v833
      %v878 = vpop.f32.mrf.mxu0
      %v879 = vadd.f32 0.0, %v878
      %v880 = vpop.f32.mrf.mxu0
      %v881 = vadd.f32 0.0, %v880
      %v882 = vpop.f32.mrf.mxu0
      %v883 = vpop.f32.mrf.mxu0
      %884 = vdwg.mxu0
      %885 = vmatprep.subr.bf16.mxu0 0
      %886 = vmatpush1.bf16.msra.mxu0 0
      %887 = vmatprep.subr.bf16.mxu0 0
      %888 = vmatpush1.bf16.msra.mxu0 0
      %889 = vmatprep.subr.bf16.mxu0 0
      %890 = vmatpush1.bf16.msra.mxu0 0
      %891 = vmatprep.subr.bf16.mxu0 0
      %892 = vmatpush1.bf16.msra.mxu0 0
      %893 = vmatprep.subr.bf16.mxu0 0
      %894 = vmatpush1.bf16.msra.mxu0 0
      %895 = vmatprep.subr.bf16.mxu0 0
      %896 = vmatpush1.bf16.msra.mxu0 0
      %897 = vmatprep.subr.bf16.mxu0 0
      %898 = vmatpush1.bf16.msra.mxu0 0
      %899 = vmatprep.subr.bf16.mxu0 0
      %900 = vmatpush1.bf16.msra.mxu0 %v842
      %901 = vmatprep.subr.bf16.mxu0 0
      %902 = vmatpush2.bf16.msra.mxu0 0
      %903 = vmatprep.subr.bf16.mxu0 0
      %904 = vmatpush2.bf16.msra.mxu0 0
      %905 = vmatprep.subr.bf16.mxu0 0
      %906 = vmatpush2.bf16.msra.mxu0 0
      %907 = vmatprep.subr.bf16.mxu0 0
      %908 = vmatpush2.bf16.msra.mxu0 0
      %909 = vmatprep.subr.bf16.mxu0 0
      %910 = vmatpush2.bf16.msra.mxu0 0
      %911 = vmatprep.subr.bf16.mxu0 0
      %912 = vmatpush2.bf16.msra.mxu0 0
      %913 = vmatprep.subr.bf16.mxu0 0
      %914 = vmatpush2.bf16.msra.mxu0 0
      %915 = vmatprep.subr.bf16.mxu0 0
      %916 = vmatpush2.bf16.msra.mxu0 0
      %917 = vmatprep.mubr.bf16.mxu0 0
      %918 = vmatmul.mubr.bf16.gmra.mxu0 %v833
      %v919 = vpop.f32.mrf.mxu0
      %v920 = vadd.f32 0.0, %v919
      %v921 = vpop.f32.mrf.mxu0
      %v922 = vpop.f32.mrf.mxu0
      %v923 = vpop.f32.mrf.mxu0
      %924 = vdwg.mxu0
      %v925 = vadd.f32 %v796, %v879
      %v926 = vadd.f32 %v797, %v881
      %v927 = vadd.f32 %v798, %v920
      %v928 = vld [vmem:[%s165] sm:$0xff]
      %s929 = scalar_lea.vmem %s1, 24
      %v930 = vld [vmem:[%s929] sm:$0xf]
      %v932 = vcombine.high %v928, %v928
      %v934 = vunpack.c.l.s4 1983009808
      %v935 = vunpack.c.0.s8 %v934
      %v936 = vlaneseq
      %v937 = vshrl.u32 %v936, 7
      %v938 = vsub.s32 %v935, %v937
      %v939 = vrot.slane %v928, %v938
      %v941 = vunpack.c.l.s4 1983009808
      %v942 = vunpack.c.0.s8 %v941
      %v943 = vlaneseq
      %v944 = vshrl.u32 %v943, 7
      %v945 = vsub.s32 %v942, %v944
      %v946 = vrot.slane %v932, %v945
      %v947 = vcombine.high %v939, %v939
      %v948 = vcombine.high %v946, %v946
      %949 = vrot.lane.b32.xlu0 %v939, 92
      %v950 = vpop.permute.xlu0 %949
      %951 = vrot.lane.b32.xlu0 %v947, 92
      %v952 = vpop.permute.xlu0 %951
      %953 = vrot.lane.b32.xlu0 %v946, 92
      %v954 = vpop.permute.xlu0 %953
      %955 = vrot.lane.b32.xlu0 %v948, 92
      %v956 = vpop.permute.xlu0 %955
      %vm957 = vcmask 752640
      %v958 = vsel %vm957, %v950, %v952
      %v959 = vsel %vm957, %v952, %v954
      %v960 = vsel %vm957, %v954, %v956
      %v962 = vsel %vm207, %v930, 0
      %v965 = vsel %vm211, %v958, 0
      %v968 = vsel %vm211, %v959, 0
      %v971 = vsel %vm211, %v960, 0
      %973 = vmatprep.subr.bf16.mxu0 0
      %974 = vmatpush1.bf16.msra.mxu0 0
      %975 = vmatprep.subr.bf16.mxu0 0
      %976 = vmatpush1.bf16.msra.mxu0 0
      %977 = vmatprep.subr.bf16.mxu0 0
      %978 = vmatpush1.bf16.msra.mxu0 0
      %979 = vmatprep.subr.bf16.mxu0 0
      %980 = vmatpush1.bf16.msra.mxu0 0
      %981 = vmatprep.subr.bf16.mxu0 0
      %982 = vmatpush1.bf16.msra.mxu0 0
      %983 = vmatprep.subr.bf16.mxu0 0
      %984 = vmatpush1.bf16.msra.mxu0 0
      %985 = vmatprep.subr.bf16.mxu0 0
      %986 = vmatpush1.bf16.msra.mxu0 0
      %987 = vmatprep.subr.bf16.mxu0 %v968
      %988 = vmatpush1.bf16.msra.mxu0 %v965
      %989 = vmatprep.subr.bf16.mxu0 0
      %990 = vmatpush2.bf16.msra.mxu0 0
      %991 = vmatprep.subr.bf16.mxu0 0
      %992 = vmatpush2.bf16.msra.mxu0 0
      %993 = vmatprep.subr.bf16.mxu0 0
      %994 = vmatpush2.bf16.msra.mxu0 0
      %995 = vmatprep.subr.bf16.mxu0 0
      %996 = vmatpush2.bf16.msra.mxu0 0
      %997 = vmatprep.subr.bf16.mxu0 0
      %998 = vmatpush2.bf16.msra.mxu0 0
      %999 = vmatprep.subr.bf16.mxu0 0
      %1000 = vmatpush2.bf16.msra.mxu0 0
      %1001 = vmatprep.subr.bf16.mxu0 0
      %1002 = vmatpush2.bf16.msra.mxu0 0
      %1003 = vmatprep.subr.bf16.mxu0 0
      %1004 = vmatpush2.bf16.msra.mxu0 0
      %1005 = vmatprep.mubr.bf16.mxu0 0
      %1006 = vmatmul.mubr.bf16.gmra.mxu0 %v962
      %v1007 = vpop.f32.mrf.mxu0
      %v1008 = vadd.f32 0.0, %v1007
      %v1009 = vpop.f32.mrf.mxu0
      %v1010 = vadd.f32 0.0, %v1009
      %v1011 = vpop.f32.mrf.mxu0
      %v1012 = vpop.f32.mrf.mxu0
      %1013 = vdwg.mxu0
      %1014 = vmatprep.subr.bf16.mxu0 0
      %1015 = vmatpush1.bf16.msra.mxu0 0
      %1016 = vmatprep.subr.bf16.mxu0 0
      %1017 = vmatpush1.bf16.msra.mxu0 0
      %1018 = vmatprep.subr.bf16.mxu0 0
      %1019 = vmatpush1.bf16.msra.mxu0 0
      %1020 = vmatprep.subr.bf16.mxu0 0
      %1021 = vmatpush1.bf16.msra.mxu0 0
      %1022 = vmatprep.subr.bf16.mxu0 0
      %1023 = vmatpush1.bf16.msra.mxu0 0
      %1024 = vmatprep.subr.bf16.mxu0 0
      %1025 = vmatpush1.bf16.msra.mxu0 0
      %1026 = vmatprep.subr.bf16.mxu0 0
      %1027 = vmatpush1.bf16.msra.mxu0 0
      %1028 = vmatprep.subr.bf16.mxu0 0
      %1029 = vmatpush1.bf16.msra.mxu0 %v971
      %1030 = vmatprep.subr.bf16.mxu0 0
      %1031 = vmatpush2.bf16.msra.mxu0 0
      %1032 = vmatprep.subr.bf16.mxu0 0
      %1033 = vmatpush2.bf16.msra.mxu0 0
      %1034 = vmatprep.subr.bf16.mxu0 0
      %1035 = vmatpush2.bf16.msra.mxu0 0
      %1036 = vmatprep.subr.bf16.mxu0 0
      %1037 = vmatpush2.bf16.msra.mxu0 0
      %1038 = vmatprep.subr.bf16.mxu0 0
      %1039 = vmatpush2.bf16.msra.mxu0 0
      %1040 = vmatprep.subr.bf16.mxu0 0
      %1041 = vmatpush2.bf16.msra.mxu0 0
      %1042 = vmatprep.subr.bf16.mxu0 0
      %1043 = vmatpush2.bf16.msra.mxu0 0
      %1044 = vmatprep.subr.bf16.mxu0 0
      %1045 = vmatpush2.bf16.msra.mxu0 0
      %1046 = vmatprep.mubr.bf16.mxu0 0
      %1047 = vmatmul.mubr.bf16.gmra.mxu0 %v962
      %v1048 = vpop.f32.mrf.mxu0
      %v1049 = vadd.f32 0.0, %v1048
      %v1050 = vpop.f32.mrf.mxu0
      %v1051 = vpop.f32.mrf.mxu0
      %v1052 = vpop.f32.mrf.mxu0
      %1053 = vdwg.mxu0
      %v1054 = vadd.f32 %v925, %v1008
      %v1055 = vadd.f32 %v926, %v1010
      %v1056 = vadd.f32 %v927, %v1049
      %v1057 = vld [vmem:[%s165] sm:$0xff]
      %s1058 = scalar_lea.vmem %s1, 28
      %v1059 = vld [vmem:[%s1058] sm:$0xf]
      %v1061 = vcombine.high %v1057, %v1057
      %v1063 = vunpack.c.l.s4 1983009808
      %v1064 = vunpack.c.0.s8 %v1063
      %v1065 = vlaneseq
      %v1066 = vshrl.u32 %v1065, 7
      %v1067 = vsub.s32 %v1064, %v1066
      %v1068 = vrot.slane %v1057, %v1067
      %v1070 = vunpack.c.l.s4 1983009808
      %v1071 = vunpack.c.0.s8 %v1070
      %v1072 = vlaneseq
      %v1073 = vshrl.u32 %v1072, 7
      %v1074 = vsub.s32 %v1071, %v1073
      %v1075 = vrot.slane %v1061, %v1074
      %v1076 = vcombine.high %v1068, %v1068
      %v1077 = vcombine.high %v1075, %v1075
      %1078 = vrot.lane.b32.xlu0 %v1068, 91
      %v1079 = vpop.permute.xlu0 %1078
      %1080 = vrot.lane.b32.xlu0 %v1076, 91
      %v1081 = vpop.permute.xlu0 %1080
      %1082 = vrot.lane.b32.xlu0 %v1075, 91
      %v1083 = vpop.permute.xlu0 %1082
      %1084 = vrot.lane.b32.xlu0 %v1077, 91
      %v1085 = vpop.permute.xlu0 %1084
      %vm1086 = vcmask 744448
      %v1087 = vsel %vm1086, %v1079, %v1081
      %v1088 = vsel %vm1086, %v1081, %v1083
      %v1089 = vsel %vm1086, %v1083, %v1085
      %v1091 = vsel %vm207, %v1059, 0
      %v1094 = vsel %vm211, %v1087, 0
      %v1097 = vsel %vm211, %v1088, 0
      %v1100 = vsel %vm211, %v1089, 0
      %1102 = vmatprep.subr.bf16.mxu0 0
      %1103 = vmatpush1.bf16.msra.mxu0 0
      %1104 = vmatprep.subr.bf16.mxu0 0
      %1105 = vmatpush1.bf16.msra.mxu0 0
      %1106 = vmatprep.subr.bf16.mxu0 0
      %1107 = vmatpush1.bf16.msra.mxu0 0
      %1108 = vmatprep.subr.bf16.mxu0 0
      %1109 = vmatpush1.bf16.msra.mxu0 0
      %1110 = vmatprep.subr.bf16.mxu0 0
      %1111 = vmatpush1.bf16.msra.mxu0 0
      %1112 = vmatprep.subr.bf16.mxu0 0
      %1113 = vmatpush1.bf16.msra.mxu0 0
      %1114 = vmatprep.subr.bf16.mxu0 0
      %1115 = vmatpush1.bf16.msra.mxu0 0
      %1116 = vmatprep.subr.bf16.mxu0 %v1097
      %1117 = vmatpush1.bf16.msra.mxu0 %v1094
      %1118 = vmatprep.subr.bf16.mxu0 0
      %1119 = vmatpush2.bf16.msra.mxu0 0
      %1120 = vmatprep.subr.bf16.mxu0 0
      %1121 = vmatpush2.bf16.msra.mxu0 0
      %1122 = vmatprep.subr.bf16.mxu0 0
      %1123 = vmatpush2.bf16.msra.mxu0 0
      %1124 = vmatprep.subr.bf16.mxu0 0
      %1125 = vmatpush2.bf16.msra.mxu0 0
      %1126 = vmatprep.subr.bf16.mxu0 0
      %1127 = vmatpush2.bf16.msra.mxu0 0
      %1128 = vmatprep.subr.bf16.mxu0 0
      %1129 = vmatpush2.bf16.msra.mxu0 0
      %1130 = vmatprep.subr.bf16.mxu0 0
      %1131 = vmatpush2.bf16.msra.mxu0 0
      %1132 = vmatprep.subr.bf16.mxu0 0
      %1133 = vmatpush2.bf16.msra.mxu0 0
      %1134 = vmatprep.mubr.bf16.mxu0 0
      %1135 = vmatmul.mubr.bf16.gmra.mxu0 %v1091
      %v1136 = vpop.f32.mrf.mxu0
      %v1137 = vadd.f32 0.0, %v1136
      %v1138 = vpop.f32.mrf.mxu0
      %v1139 = vadd.f32 0.0, %v1138
      %v1140 = vpop.f32.mrf.mxu0
      %v1141 = vpop.f32.mrf.mxu0
      %1142 = vdwg.mxu0
      %1143 = vmatprep.subr.bf16.mxu0 0
      %1144 = vmatpush1.bf16.msra.mxu0 0
      %1145 = vmatprep.subr.bf16.mxu0 0
      %1146 = vmatpush1.bf16.msra.mxu0 0
      %1147 = vmatprep.subr.bf16.mxu0 0
      %1148 = vmatpush1.bf16.msra.mxu0 0
      %1149 = vmatprep.subr.bf16.mxu0 0
      %1150 = vmatpush1.bf16.msra.mxu0 0
      %1151 = vmatprep.subr.bf16.mxu0 0
      %1152 = vmatpush1.bf16.msra.mxu0 0
      %1153 = vmatprep.subr.bf16.mxu0 0
      %1154 = vmatpush1.bf16.msra.mxu0 0
      %1155 = vmatprep.subr.bf16.mxu0 0
      %1156 = vmatpush1.bf16.msra.mxu0 0
      %1157 = vmatprep.subr.bf16.mxu0 0
      %1158 = vmatpush1.bf16.msra.mxu0 %v1100
      %1159 = vmatprep.subr.bf16.mxu0 0
      %1160 = vmatpush2.bf16.msra.mxu0 0
      %1161 = vmatprep.subr.bf16.mxu0 0
      %1162 = vmatpush2.bf16.msra.mxu0 0
      %1163 = vmatprep.subr.bf16.mxu0 0
      %1164 = vmatpush2.bf16.msra.mxu0 0
      %1165 = vmatprep.subr.bf16.mxu0 0
      %1166 = vmatpush2.bf16.msra.mxu0 0
      %1167 = vmatprep.subr.bf16.mxu0 0
      %1168 = vmatpush2.bf16.msra.mxu0 0
      %1169 = vmatprep.subr.bf16.mxu0 0
      %1170 = vmatpush2.bf16.msra.mxu0 0
      %1171 = vmatprep.subr.bf16.mxu0 0
      %1172 = vmatpush2.bf16.msra.mxu0 0
      %1173 = vmatprep.subr.bf16.mxu0 0
      %1174 = vmatpush2.bf16.msra.mxu0 0
      %1175 = vmatprep.mubr.bf16.mxu0 0
      %1176 = vmatmul.mubr.bf16.gmra.mxu0 %v1091
      %v1177 = vpop.f32.mrf.mxu0
      %v1178 = vadd.f32 0.0, %v1177
      %v1179 = vpop.f32.mrf.mxu0
      %v1180 = vpop.f32.mrf.mxu0
      %v1181 = vpop.f32.mrf.mxu0
      %1182 = vdwg.mxu0
      %v1183 = vadd.f32 %v1054, %v1137
      %v1184 = vadd.f32 %v1055, %v1139
      %v1185 = vadd.f32 %v1056, %v1178
      %v1186 = vld [vmem:[%s165] sm:$0xff]
      %s1187 = scalar_lea.vmem %s1, 32
      %v1188 = vld [vmem:[%s1187] sm:$0xf]
      %v1190 = vcombine.high %v1186, %v1186
      %v1192 = vunpack.c.l.s4 1983009808
      %v1193 = vunpack.c.0.s8 %v1192
      %v1194 = vlaneseq
      %v1195 = vshrl.u32 %v1194, 7
      %v1196 = vsub.s32 %v1193, %v1195
      %v1197 = vrot.slane %v1186, %v1196
      %v1199 = vunpack.c.l.s4 1983009808
      %v1200 = vunpack.c.0.s8 %v1199
      %v1201 = vlaneseq
      %v1202 = vshrl.u32 %v1201, 7
      %v1203 = vsub.s32 %v1200, %v1202
      %v1204 = vrot.slane %v1190, %v1203
      %v1205 = vcombine.high %v1197, %v1197
      %v1206 = vcombine.high %v1204, %v1204
      %1207 = vrot.lane.b32.xlu0 %v1197, 90
      %v1208 = vpop.permute.xlu0 %1207
      %1209 = vrot.lane.b32.xlu0 %v1205, 90
      %v1210 = vpop.permute.xlu0 %1209
      %1211 = vrot.lane.b32.xlu0 %v1204, 90
      %v1212 = vpop.permute.xlu0 %1211
      %1213 = vrot.lane.b32.xlu0 %v1206, 90
      %v1214 = vpop.permute.xlu0 %1213
      %vm1215 = vcmask 736256
      %v1216 = vsel %vm1215, %v1208, %v1210
      %v1217 = vsel %vm1215, %v1210, %v1212
      %v1218 = vsel %vm1215, %v1212, %v1214
      %v1220 = vsel %vm207, %v1188, 0
      %v1223 = vsel %vm211, %v1216, 0
      %v1226 = vsel %vm211, %v1217, 0
      %v1229 = vsel %vm211, %v1218, 0
      %1231 = vmatprep.subr.bf16.mxu0 0
      %1232 = vmatpush1.bf16.msra.mxu0 0
      %1233 = vmatprep.subr.bf16.mxu0 0
      %1234 = vmatpush1.bf16.msra.mxu0 0
      %1235 = vmatprep.subr.bf16.mxu0 0
      %1236 = vmatpush1.bf16.msra.mxu0 0
      %1237 = vmatprep.subr.bf16.mxu0 0
      %1238 = vmatpush1.bf16.msra.mxu0 0
      %1239 = vmatprep.subr.bf16.mxu0 0
      %1240 = vmatpush1.bf16.msra.mxu0 0
      %1241 = vmatprep.subr.bf16.mxu0 0
      %1242 = vmatpush1.bf16.msra.mxu0 0
      %1243 = vmatprep.subr.bf16.mxu0 0
      %1244 = vmatpush1.bf16.msra.mxu0 0
      %1245 = vmatprep.subr.bf16.mxu0 %v1226
      %1246 = vmatpush1.bf16.msra.mxu0 %v1223
      %1247 = vmatprep.subr.bf16.mxu0 0
      %1248 = vmatpush2.bf16.msra.mxu0 0
      %1249 = vmatprep.subr.bf16.mxu0 0
      %1250 = vmatpush2.bf16.msra.mxu0 0
      %1251 = vmatprep.subr.bf16.mxu0 0
      %1252 = vmatpush2.bf16.msra.mxu0 0
      %1253 = vmatprep.subr.bf16.mxu0 0
      %1254 = vmatpush2.bf16.msra.mxu0 0
      %1255 = vmatprep.subr.bf16.mxu0 0
      %1256 = vmatpush2.bf16.msra.mxu0 0
      %1257 = vmatprep.subr.bf16.mxu0 0
      %1258 = vmatpush2.bf16.msra.mxu0 0
      %1259 = vmatprep.subr.bf16.mxu0 0
      %1260 = vmatpush2.bf16.msra.mxu0 0
      %1261 = vmatprep.subr.bf16.mxu0 0
      %1262 = vmatpush2.bf16.msra.mxu0 0
      %1263 = vmatprep.mubr.bf16.mxu0 0
      %1264 = vmatmul.mubr.bf16.gmra.mxu0 %v1220
      %v1265 = vpop.f32.mrf.mxu0
      %v1266 = vadd.f32 0.0, %v1265
      %v1267 = vpop.f32.mrf.mxu0
      %v1268 = vadd.f32 0.0, %v1267
      %v1269 = vpop.f32.mrf.mxu0
      %v1270 = vpop.f32.mrf.mxu0
      %1271 = vdwg.mxu0
      %1272 = vmatprep.subr.bf16.mxu0 0
      %1273 = vmatpush1.bf16.msra.mxu0 0
      %1274 = vmatprep.subr.bf16.mxu0 0
      %1275 = vmatpush1.bf16.msra.mxu0 0
      %1276 = vmatprep.subr.bf16.mxu0 0
      %1277 = vmatpush1.bf16.msra.mxu0 0
      %1278 = vmatprep.subr.bf16.mxu0 0
      %1279 = vmatpush1.bf16.msra.mxu0 0
      %1280 = vmatprep.subr.bf16.mxu0 0
      %1281 = vmatpush1.bf16.msra.mxu0 0
      %1282 = vmatprep.subr.bf16.mxu0 0
      %1283 = vmatpush1.bf16.msra.mxu0 0
      %1284 = vmatprep.subr.bf16.mxu0 0
      %1285 = vmatpush1.bf16.msra.mxu0 0
      %1286 = vmatprep.subr.bf16.mxu0 0
      %1287 = vmatpush1.bf16.msra.mxu0 %v1229
      %1288 = vmatprep.subr.bf16.mxu0 0
      %1289 = vmatpush2.bf16.msra.mxu0 0
      %1290 = vmatprep.subr.bf16.mxu0 0
      %1291 = vmatpush2.bf16.msra.mxu0 0
      %1292 = vmatprep.subr.bf16.mxu0 0
      %1293 = vmatpush2.bf16.msra.mxu0 0
      %1294 = vmatprep.subr.bf16.mxu0 0
      %1295 = vmatpush2.bf16.msra.mxu0 0
      %1296 = vmatprep.subr.bf16.mxu0 0
      %1297 = vmatpush2.bf16.msra.mxu0 0
      %1298 = vmatprep.subr.bf16.mxu0 0
      %1299 = vmatpush2.bf16.msra.mxu0 0
      %1300 = vmatprep.subr.bf16.mxu0 0
      %1301 = vmatpush2.bf16.msra.mxu0 0
      %1302 = vmatprep.subr.bf16.mxu0 0
      %1303 = vmatpush2.bf16.msra.mxu0 0
      %1304 = vmatprep.mubr.bf16.mxu0 0
      %1305 = vmatmul.mubr.bf16.gmra.mxu0 %v1220
      %v1306 = vpop.f32.mrf.mxu0
      %v1307 = vadd.f32 0.0, %v1306
      %v1308 = vpop.f32.mrf.mxu0
      %v1309 = vpop.f32.mrf.mxu0
      %v1310 = vpop.f32.mrf.mxu0
      %1311 = vdwg.mxu0
      %v1312 = vadd.f32 %v1183, %v1266
      %v1313 = vadd.f32 %v1184, %v1268
      %v1314 = vadd.f32 %v1185, %v1307
      %v1315 = vld [vmem:[%s2] sm:$0xff]
      %1317 = vset.pattern.permute.xlu0 0
      %1318 = vperm.xlu0 %1317, %v1315
      %v1319 = vpop.permute.xlu0 %1318
      %v1321 = vadd.f32 %v1312, %v1319
      %v1322 = vadd.f32 %v1313, %v1319
      %v1323 = vadd.f32 %v1314, %v1319
      %vm1324 = vcmp.gt.f32.partialorder %v1321, 0.0
      %vm1325 = vcmp.gt.f32.partialorder %v1322, 0.0
      %vm1326 = vcmp.gt.f32.partialorder %v1323, 0.0
      %1327 = vset.pattern.permute.xlu0 1
      %1328 = vperm.xlu0 %1327, %v1315
      %v1329 = vpop.permute.xlu0 %1328
      %v1331 = vmul.f32 %v1329, %v1321
      %v1332 = vmul.f32 %v1329, %v1322
      %v1333 = vmul.f32 %v1329, %v1323
      %v1334 = vsel %vm1324, %v1321, %v1331
      %v1335 = vsel %vm1325, %v1322, %v1332
      %v1336 = vsel %vm1326, %v1323, %v1333
      %1337 = vst [vmem:[%s170] sm:$0xff] %v1334
      %1338 = vst [vmem:[%s170 + $0x8] sm:$0xff] %v1335
      %1339 = vst [vmem:[%s170 + $0x10] sm:$0xff] %v1336
      %p1340 = scmp.lt.s32.totalorder %s14, 1
      %s1341 = scalar_select %p1340, %s14, 1
      %s1342 = smul.addr %s1341, 3
      %s1343 = smul.addr %s1342, 8
      %s1344 = scalar_lea.vmem %s3, %s1343
      // Predicated region
      $region33: #{conv_bn_prelu.1} parent=31 // pred_check
        %p1345 = pneg %p100
      $region34: #{conv_bn_prelu.1} parent=31 // pred_check_branch
        %1347 = sbr.rel (%p1345) target = $region36
      $region35: #{conv_bn_prelu.1} parent=31 // pred_region
        _
      $region36: #{conv_bn_prelu.1} parent=31 // pred_fallthru
        _
    $region32: #{conv_bn_prelu.1} parent=5 // pred_fallthru
      _
    %p1348 = scmp.le.s32.totalorder 2, %s9
    // Predicated region
    $region37: #{conv_bn_prelu.1} parent=5 // pred_check
      %p1349 = pneg %p1348
    $region38: #{conv_bn_prelu.1} parent=5 // pred_check_branch
      %1351 = sbr.rel (%p1349) target = $region40
    $region39: #{conv_bn_prelu.1} parent=5 // pred_region
      %s1352 = ssub.s32 %s9, 2
      // Predicated region
      $region41: #{conv_bn_prelu.1} parent=39 // pred_check
        %p1353 = pneg %p106
      $region42: #{conv_bn_prelu.1} parent=39 // pred_check_branch
        %1355 = sbr.rel (%p1353) target = $region44
      $region43: #{conv_bn_prelu.1} parent=39 // pred_region
        %p1356 = scmp.lt.s32.totalorder %s15, 1
        %s1357 = scalar_select %p1356, %s15, 1
        %s1358 = smul.addr %s1357, 3
        %s1359 = smul.addr %s1358, 8
        %s1360 = scalar_lea.vmem %s3, %s1359
      $region44: #{conv_bn_prelu.1} parent=39 // pred_fallthru
        _
    $region40: #{conv_bn_prelu.1} parent=5 // pred_fallthru
      _
  $region6: #{conv_bn_prelu.1} parent=0 // loop_footer
    %s13 = sadd.s32 1, %s9
  $region7: #{conv_bn_prelu.1} parent=0 // loop_footer_branch
    %8 = sbr.rel target = $region3
  $region8: #{conv_bn_prelu.1} parent=0 // loop_exit
    _

</llo_original>
